<compile_context>
chip_gen: v7x
topology: tpu7x:2x2x1
jax: 0.10.0
libtpu: 0.0.40
codegen_flags: <defaults>
</compile_context>

<pallas_src>
import functools
import math

import numpy as np
import jax
import jax.numpy as jnp
from jax.experimental import pallas as pl
from jax.experimental.pallas import tpu as pltpu


# --------------------------- hardware-derived knobs --------------------------


@functools.lru_cache(maxsize=None)
def _vmem_limit_bytes():
    """Scoped-VMEM cap: ~100 MiB on 128 MiB chips (v5e/v6e), ~48 MiB on v7x."""
    try:
        cap = int(pltpu.get_tpu_info().vmem_capacity_bytes)
    except Exception:
        cap = 0
    if cap <= 0:
        cap = 64 * 1024 * 1024
    return int(max(32 * 1024 * 1024,
                   min(cap - 16 * 1024 * 1024, 100 * 1024 * 1024)))


@functools.lru_cache(maxsize=None)
def _roll_moves_to_higher_indices():
    """One-time probe: True iff pltpu.roll(x, +1) matches jnp.roll (y[i]=x[i-1])."""
    def k(x_ref, o_ref):
        o_ref[...] = pltpu.roll(x_ref[...], shift=1, axis=1)
    x = jnp.broadcast_to(jnp.arange(128, dtype=jnp.float32), (8, 128))
    y = pl.pallas_call(k, out_shape=jax.ShapeDtypeStruct((8, 128), jnp.float32))(x)
    return bool(y[0, 1] == 0.0)


@functools.lru_cache(maxsize=None)
def _rope_roll_shifts(d_model, d_head):
    """(shift giving x[:, j+hh], shift giving x[:, j-hh]) for pltpu.roll."""
    hh = d_head // 2
    fwd = (d_model - hh) % d_model      # x[:, j+hh] under jnp.roll convention
    bwd = hh                            # x[:, j-hh] under jnp.roll convention
    if not _roll_moves_to_higher_indices():
        fwd, bwd = bwd, fwd
    return fwd, bwd


# ----------------------------- Pallas kernels -------------------------------


def _block_kernel(num_heads, d_head, eps, shift_fwd, shift_bwd,
                  x_ref, g1_ref, wqkv_ref, wo_ref, g2_ref, w13_ref, w2_ref,
                  cos_ref, sgn_ref, out_ref):
    """RMSNorm -> MHSA (RoPE, causal) -> residual -> RMSNorm -> SwiGLU -> residual."""
    x = x_ref[0].astype(jnp.float32)                 # (S, D), residual math in f32
    S, D = x.shape
    H, dh = num_heads, d_head
    hh = dh // 2
    d_ff = w2_ref.shape[0]

    cos_t = cos_ref[...]                             # (S, D) f32 (hoisted loads)
    sgn_t = sgn_ref[...]                             # (S, D) f32
    # lanes [0, hh) of every d_head block pull their rotate-half partner from +hh,
    # lanes [hh, dh) from -hh (per-head-contiguous half-split layout).
    half_mask = (jax.lax.broadcasted_iota(jnp.int32, (S, D), 1) % dh) < hh

    def rmsnorm(v, g):                               # statistics in f32
        ms = jnp.mean(v * v, axis=-1, keepdims=True)
        return v * jax.lax.rsqrt(ms + eps) * g

    def rope(v):
        # per-head-block rotate-half via two XLU rolls + lane select
        rot = jnp.where(half_mask,
                        pltpu.roll(v, shift=shift_fwd, axis=1),
                        pltpu.roll(v, shift=shift_bwd, axis=1))
        return v * cos_t + rot * sgn_t

    # ---- ln1 + fused QKV projection (single bf16 MXU matmul) ----
    xn = rmsnorm(x, g1_ref[...]).astype(jnp.bfloat16)
    qkv = jnp.dot(xn, wqkv_ref[...], preferred_element_type=jnp.float32)  # (S, 3D)
    q = rope(qkv[:, :D]).astype(jnp.bfloat16)        # 1/sqrt(dh) folded into Wq
    k = rope(qkv[:, D:2 * D]).astype(jnp.bfloat16)
    v = qkv[:, 2 * D:].astype(jnp.bfloat16)

    causal = (jax.lax.broadcasted_iota(jnp.int32, (S, S), 0)
              >= jax.lax.broadcasted_iota(jnp.int32, (S, S), 1))

    # Per-head score/softmax/PV: ONE K=d_head contraction per head; head outputs
    # stay in registers and are concatenated lane-dense straight into Wo.
    # TODO(synk): for large H / long S switch to a fori_loop or head grid axis with
    # flash-style KV streaming (bounds vreg live ranges, fits v7x 64 MiB VMEM).
    head_outs = []
    for h in range(H):
        sl = slice(h * dh, (h + 1) * dh)             # lane-aligned head slice
        s = jax.lax.dot_general(q[:, sl], k[:, sl], (((1,), (1,)), ((), ())),
                                preferred_element_type=jnp.float32)       # (S, S)
        s = jnp.where(causal, s, -1e30)              # finite sentinel (no -inf NaNs)
        m = jnp.max(s, axis=-1, keepdims=True)
        p = jnp.exp(s - m)
        l = jnp.sum(p, axis=-1, keepdims=True)
        oh = jnp.dot(p.astype(jnp.bfloat16), v[:, sl],
                     preferred_element_type=jnp.float32)
        head_outs.append(oh * pl.reciprocal(l, approx=True))
    attn = head_outs[0] if H == 1 else jnp.concatenate(head_outs, axis=1)
    attn = attn.astype(jnp.bfloat16)                 # (S, D), lane-dense

    # ---- single full-width output projection + residual ----
    y = x + jnp.dot(attn, wo_ref[...], preferred_element_type=jnp.float32)

    # ---- ln2 + SwiGLU (fused gate/up matmul) + residual ----
    yn = rmsnorm(y, g2_ref[...]).astype(jnp.bfloat16)
    ab = jnp.dot(yn, w13_ref[...], preferred_element_type=jnp.float32)    # (S, 2F)
    a, b = ab[:, :d_ff], ab[:, d_ff:]
    hact = (a * jax.nn.sigmoid(a) * b).astype(jnp.bfloat16)
    out = y + jnp.dot(hact, w2_ref[...], preferred_element_type=jnp.float32)
    out_ref[0] = out.astype(out_ref.dtype)           # residual stream stored bf16


def _final_kernel(eps, x_ref, g_ref, w_ref, out_ref, xn_ref):
    """Final RMSNorm (computed once per batch row) + vocab-tiled LM head."""
    @pl.when(pl.program_id(1) == 0)
    def _():
        x = x_ref[0].astype(jnp.float32)
        ms = jnp.mean(x * x, axis=-1, keepdims=True)
        xn_ref[...] = (x * jax.lax.rsqrt(ms + eps) * g_ref[...]).astype(jnp.bfloat16)
    out_ref[0] = jnp.dot(xn_ref[...], w_ref[...], preferred_element_type=jnp.float32)


# ------------------------------ JAX wrappers ---------------------------------


def transformer_block(x, lp, cos_t, sgn_t, num_heads, eps=1e-5):
    B, S, D = x.shape
    d_head = D // num_heads
    d_ff = lp["w2_t"].shape[0]
    shift_fwd, shift_bwd = _rope_roll_shifts(D, d_head)
    kernel = functools.partial(_block_kernel, num_heads, d_head, eps,
                               shift_fwd, shift_bwd)

    def const(shape):
        # grid-invariant blocks (weights / RoPE tables)
        # TODO(synk): add pipeline_mode=pl.Buffered(1) + (D, ff_tile) streaming of
        # W13/W2 for v7x's 64 MiB VMEM at production d_model/d_ff.
        return pl.BlockSpec(shape, lambda b: (0,) * len(shape))

    return pl.pallas_call(
        kernel,
        out_shape=jax.ShapeDtypeStruct((B, S, D), jnp.bfloat16),  # bf16 residual stream
        grid=(B,),
        in_specs=[
            pl.BlockSpec((1, S, D), lambda b: (b, 0, 0)),   # x (bf16)
            const((1, D)),                                  # ln1 gamma (f32)
            const((D, 3 * D)),                              # fused Wqkv (bf16)
            const((D, D)),                                  # Wo (bf16)
            const((1, D)),                                  # ln2 gamma (f32)
            const((D, 2 * d_ff)),                           # fused W1|W3 (bf16)
            const((d_ff, D)),                               # W2 (bf16)
            const((S, D)), const((S, D)),                   # RoPE cos / signed-sin (f32)
        ],
        out_specs=pl.BlockSpec((1, S, D), lambda b: (b, 0, 0)),
        compiler_params=pltpu.CompilerParams(
            dimension_semantics=("parallel",),
            vmem_limit_bytes=_vmem_limit_bytes()),
    )(x, lp["g1"], lp["wqkv_t"], lp["wo_t"], lp["g2"], lp["w13_t"], lp["w2_t"],
      cos_t, sgn_t)


def final_head(x, g_final, lm_t, eps=1e-5, tile_v=1024):
    B, S, D = x.shape
    V = lm_t.shape[1]
    tv = min(tile_v, V)
    assert V % tv == 0 and tv % 128 == 0, "vocab must tile into lane-dense blocks"
    kernel = functools.partial(_final_kernel, eps)
    return pl.pallas_call(
        kernel,
        out_shape=jax.ShapeDtypeStruct((B, S, V), jnp.float32),
        grid=(B, V // tv),                                  # vocab axis streamed
        in_specs=[
            pl.BlockSpec((1, S, D), lambda b, j: (b, 0, 0)),
            pl.BlockSpec((1, D), lambda b, j: (0, 0)),
            pl.BlockSpec((D, tv), lambda b, j: (0, j)),     # (D, TILE_V) weight tile
        ],
        out_specs=pl.BlockSpec((1, S, tv), lambda b, j: (b, 0, j)),
        scratch_shapes=[pltpu.VMEM((S, D), jnp.bfloat16)],  # hoisted RMSNorm result
        compiler_params=pltpu.CompilerParams(
            dimension_semantics=("parallel", "arbitrary"),  # scratch reused over vocab
            vmem_limit_bytes=_vmem_limit_bytes()),
    )(x, g_final, lm_t)


def transformer_lm_forward(kparams, tokens, num_heads):
    # token-embedding gather stays in plain JAX (data-dependent gather = glue)
    x = jnp.take(kparams["emb"], tokens, axis=0).astype(jnp.bfloat16)   # (B, S, D)
    S = tokens.shape[1]
    cos_t = kparams["cos_t"][:S]
    sgn_t = kparams["sgn_t"][:S]
    # TODO(synk): optionally fuse all layers into one pallas_call with a leading
    # "arbitrary" layer axis keeping the residual VMEM-resident.
    for lp in kparams["layers"]:
        x = transformer_block(x, lp, cos_t, sgn_t, num_heads)
    return final_head(x, kparams["g_final"], kparams["lm_t"])


# ------------------------- deterministic parameters --------------------------


def _trunc_normal(key, shape, std):
    return std * jax.random.truncated_normal(key, -3.0, 3.0, shape, jnp.float32)


def _linear_t(key, d_in, d_out):
    # torch Linear stores (d_out, d_in); the kernels consume the transpose.
    std = math.sqrt(2.0 / (d_in + d_out))
    return _trunc_normal(key, (d_out, d_in), std).T


def init_params(key, vocab_size, num_layers, d_model, num_heads, d_ff):
    """Raw f32 parameters with the reference (PyTorch-module) semantics."""
    keys = jax.random.split(key, 2 + 7 * num_layers)
    emb = _trunc_normal(keys[0], (vocab_size, d_model), 1.0)
    lm_t = _linear_t(keys[1], d_model, vocab_size)
    layers = []
    for l in range(num_layers):
        k = keys[2 + 7 * l: 2 + 7 * (l + 1)]
        layers.append(dict(
            g1=jnp.ones((1, d_model), jnp.float32),
            wq_t=_linear_t(k[0], d_model, d_model),
            wk_t=_linear_t(k[1], d_model, d_model),
            wv_t=_linear_t(k[2], d_model, d_model),
            wo_t=_linear_t(k[3], d_model, d_model),
            g2=jnp.ones((1, d_model), jnp.float32),
            w1_t=_linear_t(k[4], d_model, d_ff),
            w2_t=_linear_t(k[5], d_ff, d_model),
            w3_t=_linear_t(k[6], d_model, d_ff),
        ))
    return dict(emb=emb, layers=layers,
                g_final=jnp.ones((1, d_model), jnp.float32), lm_t=lm_t)


def _head_halfsplit_perm(d_model, num_heads):
    """Per-head-contiguous half-split: within each head's d_head block, even
    RoPE pair-elements occupy the first d_head/2 lanes, odd the last d_head/2."""
    d_head = d_model // num_heads
    hh = d_head // 2
    idx = np.zeros(d_model, np.int32)
    for h in range(num_heads):
        base = h * d_head
        for i in range(hh):
            idx[base + i] = base + 2 * i            # even pair elements
            idx[base + hh + i] = base + 2 * i + 1   # odd pair elements
    return idx


def _rope_tables(theta, d_model, num_heads, max_seq_len):
    """Per-head half-split RoPE tables: rope(x) = x*COS + blockroll(x)*SGN."""
    d_head = d_model // num_heads
    pos = np.arange(max_seq_len, dtype=np.float32)
    inv = 1.0 / theta ** (np.arange(0, d_head, 2, dtype=np.float32) / d_head)
    ang = np.outer(pos, inv)                         # (S, d_head//2)
    cos, sin = np.cos(ang), np.sin(ang)
    cos_blk = np.concatenate([cos, cos], axis=1)     # (S, d_head)
    sgn_blk = np.concatenate([-sin, sin], axis=1)    # (S, d_head)
    cos_t = np.tile(cos_blk, (1, num_heads))         # (S, D)
    sgn_t = np.tile(sgn_blk, (1, num_heads))         # (S, D)
    return jnp.asarray(cos_t, jnp.float32), jnp.asarray(sgn_t, jnp.float32)


def prepare_kernel_params(params, num_heads, rope_theta, max_seq_len):
    """Fuse / permute / bf16-cast the raw parameters for the Pallas kernels."""
    D = params["emb"].shape[1]
    assert D % num_heads == 0
    d_head = D // num_heads
    assert d_head % 2 == 0
    assert D % 128 == 0, "d_model must be lane-dense (multiple of 128)"
    _rope_roll_shifts(D, d_head)                     # warm the roll-convention probe
    idx = _head_halfsplit_perm(D, num_heads)
    scale = 1.0 / math.sqrt(d_head)                  # fold attn scale (RoPE is linear)
    layers = []
    for lp in params["layers"]:
        wq = (lp["wq_t"] * scale)[:, idx]
        wk = lp["wk_t"][:, idx]
        layers.append(dict(
            g1=lp["g1"],
            wqkv_t=jnp.concatenate([wq, wk, lp["wv_t"]], axis=1).astype(jnp.bfloat16),
            wo_t=lp["wo_t"].astype(jnp.bfloat16),
            g2=lp["g2"],
            w13_t=jnp.concatenate([lp["w1_t"], lp["w3_t"]],
                                  axis=1).astype(jnp.bfloat16),
            w2_t=lp["w2_t"].astype(jnp.bfloat16),
        ))
    cos_t, sgn_t = _rope_tables(rope_theta, D, num_heads, max_seq_len)
    return dict(emb=params["emb"], layers=layers, g_final=params["g_final"],
                lm_t=params["lm_t"].astype(jnp.bfloat16), cos_t=cos_t, sgn_t=sgn_t)


# ------------------------- pure-JAX reference (check) ------------------------


def _rope_ref(t, theta):
    S, dh = t.shape[-2], t.shape[-1]
    pos = jnp.arange(S, dtype=jnp.float32)
    inv = 1.0 / theta ** (jnp.arange(0, dh, 2, dtype=jnp.float32) / dh)
    ang = pos[:, None] * inv[None, :]
    cos, sin = jnp.cos(ang), jnp.sin(ang)
    te, to = t[..., ::2], t[..., 1::2]
    re = te * cos - to * sin
    ro = te * sin + to * cos
    return jnp.stack([re, ro], axis=-1).reshape(t.shape)


def ref_forward(params, tokens, num_heads, theta, eps=1e-5):
    hp = jax.lax.Precision.HIGHEST
    x = jnp.take(params["emb"], tokens, axis=0)
    B, S, D = x.shape
    dh = D // num_heads

    def rms(v, g):
        return v * jax.lax.rsqrt(jnp.mean(v * v, -1, keepdims=True) + eps) * g

    causal = jnp.tril(jnp.ones((S, S), bool))
    for lp in params["layers"]:
        xn = rms(x, lp["g1"])
        q = jnp.matmul(xn, lp["wq_t"], precision=hp)
        k = jnp.matmul(xn, lp["wk_t"], precision=hp)
        v = jnp.matmul(xn, lp["wv_t"], precision=hp)
        q = q.reshape(B, S, num_heads, dh).transpose(0, 2, 1, 3)
        k = k.reshape(B, S, num_heads, dh).transpose(0, 2, 1, 3)
        v = v.reshape(B, S, num_heads, dh).transpose(0, 2, 1, 3)
        q, k = _rope_ref(q, theta), _rope_ref(k, theta)
        sc = jnp.einsum("bhqd,bhkd->bhqk", q, k, precision=hp) / math.sqrt(dh)
        sc = jnp.where(causal, sc, -jnp.inf)
        p = jax.nn.softmax(sc, axis=-1)
        o = jnp.einsum("bhqk,bhkd->bhqd", p, v, precision=hp)
        o = o.transpose(0, 2, 1, 3).reshape(B, S, D)
        y = x + jnp.matmul(o, lp["wo_t"], precision=hp)
        yn = rms(y, lp["g2"])
        a = jnp.matmul(yn, lp["w1_t"], precision=hp)
        b = jnp.matmul(yn, lp["w3_t"], precision=hp)
        x = y + jnp.matmul(a * jax.nn.sigmoid(a) * b, lp["w2_t"], precision=hp)
    xn = rms(x, params["g_final"])
    return jnp.matmul(xn, params["lm_t"], precision=hp)


# ----------------------------------- main ------------------------------------


if __name__ == "__main__":
    # small but MXU/lane-friendly shapes: d_head=128, D/d_ff/V multiples of 128.
    vocab_size = 1024
    context_length = 32
    num_layers = 2
    d_model = 256
    num_heads = 2
    d_ff = 512
    rope_theta = 10000.0
    batch, seq = 2, 16

    key = jax.random.PRNGKey(0)
    k_params, k_tok = jax.random.split(key)
    params = init_params(k_params, vocab_size, num_layers, d_model, num_heads, d_ff)
    kparams = prepare_kernel_params(params, num_heads, rope_theta, context_length)
    tokens = jax.random.randint(k_tok, (batch, seq), 0, vocab_size, jnp.int32)

    logits = transformer_lm_forward(kparams, tokens, num_heads)
    logits = jax.block_until_ready(logits)
    assert logits.shape == (batch, seq, vocab_size)
    assert bool(jnp.all(jnp.isfinite(logits)))

    # full-f32 (HIGHEST) reference of the PyTorch module; tolerance sized for the
    # bf16 weights / activations / residual stream in the kernels (norm, softmax
    # stats and matmul accumulation are f32).
    ref = jax.block_until_ready(ref_forward(params, tokens, num_heads, rope_theta))
    np.testing.assert_allclose(np.asarray(logits), np.asarray(ref),
                               rtol=5e-2, atol=5e-2)

    print("KERNEL_OK")
</pallas_src>

<mosaic_0001>
module attributes {stable_mosaic.version = 11 : i64} {
  func.func @k(%arg0: memref<8x128xf32, #tpu.memory_space<vmem>>, %arg1: memref<8x128xf32, #tpu.memory_space<vmem>>) attributes {dimension_semantics = [], scalar_prefetch = 0 : i64, scratch_operands = 0 : i64, tpu.core_type = #tpu.core_type<tc>} {
    %c0 = arith.constant 0 : index
    %c0_0 = arith.constant 0 : index
    %0 = vector.load %arg0[%c0, %c0_0] : memref<8x128xf32, #tpu.memory_space<vmem>>, vector<8x128xf32>
    %c1_i32 = arith.constant 1 : i32
    %1 = tpu.dynamic_rotate %0 by %c1_i32 dim 1 : vector<8x128xf32>, i32 -> vector<8x128xf32>
    %c0_1 = arith.constant 0 : index
    %c0_2 = arith.constant 0 : index
    %2 = vector.load %arg1[%c0_1, %c0_2] : memref<8x128xf32, #tpu.memory_space<vmem>>, vector<8x128xf32>
    tpu.vector_store %arg1[%c0_1, %c0_2], %1 {strides = array<i32>} : memref<8x128xf32, #tpu.memory_space<vmem>>, vector<8x128xf32>,
    return
  }
}

</mosaic_0001>

<llo_original>
// kernel: tpu_custom_call.1
$region0: #{tpu_custom_call.1}
  #allocation0 [shape = 'u32[]', space=smem, size = 0x4, offset = 0x4, fixed_abs, tag = 'smem constant byte address 0x4 - core index']
  #allocation1 [shape = 'u32[144,128]{1,0:T(1,128)}', space=vmem, size = 0x12000, scoped, tag = 'internal scratch']
  %s0 = inlined_call_operand.hbm [shape: f32[8,128], index: 0, kind: input, shape index: {}]
  %s1 = inlined_call_operand.hbm [shape: f32[8,128], index: 1, kind: output, shape index: {}]
  %s2 = sld [smem:[#allocation0]]
  $region18: #{tpu_custom_call.1} parent=0
    _
  %s4 = ssub.s32 1, %s2
  %s5 = scalar_select 0, %s4, %s2
  $region1: #{tpu_custom_call.1} parent=0
    #allocation2 [shape = 'u8[4096]{0}', space=vmem, size = 0x1000, scoped, tag = 'input window, operand 0, single buffered']
    #allocation3 [shape = 's32[1]{0}', space=sflag, size = 0x4, scoped, tag = 'scoped memory for tpu_custom_call.1']
    #allocation4 [shape = 's32[1]{0}', space=sflag, size = 0x4, scoped, tag = 'scoped memory for tpu_custom_call.1']
    #allocation5 [shape = 'u8[4096]{0}', space=vmem, size = 0x1000, scoped, tag = 'output window, operand 0, single buffered']
    %6 = vsyncpa [#allocation3], 0
    %7 = vsyncpa [#allocation4], 0
    // Predicated region
    $region2: #{tpu_custom_call.1} parent=1 // pred_check
      _
    $region3: #{tpu_custom_call.1} parent=1 // pred_check_branch
      %9 = sbr.rel (0) target = $region5
    $region4: #{tpu_custom_call.1} parent=1 // pred_region
      %s11 = ssub.s32 128, 128
      %12 = vsyncadd [#allocation3], %s11
      %s14 = sshll.u32 [#allocation2], 4
      %s15 = int_to_ptr.vmem [resolvable:$true] %s14
      %17 = dma.hbm_to_vmem [thread:$0]  %s0, 128, %s15, [#allocation3]
    $region5: #{tpu_custom_call.1} parent=1 // pred_fallthru
      _
    // Predicated region
    $region6: #{tpu_custom_call.1} parent=1 // pred_check
      _
    $region7: #{tpu_custom_call.1} parent=1 // pred_check_branch
      %19 = sbr.rel (0) target = $region9
    $region8: #{tpu_custom_call.1} parent=1 // pred_region
      %20 = dma.done [#allocation3], 128
    $region9: #{tpu_custom_call.1} parent=1 // pred_fallthru
      _
    %v21 = vld [vmem:[#allocation2] sm:$0xff]
    %22 = vrot.lane.b32.xlu0 %v21, 1
    %v23 = vpop.permute.xlu0 %22
    %24 = vst [vmem:[#allocation5] sm:$0xff] %v23
    // Predicated region
    $region10: #{tpu_custom_call.1} parent=1 // pred_check
      _
    $region11: #{tpu_custom_call.1} parent=1 // pred_check_branch
      %26 = sbr.rel (0) target = $region13
    $region12: #{tpu_custom_call.1} parent=1 // pred_region
      %s28 = ssub.s32 128, 128
      %29 = vsyncadd [#allocation4], %s28
      %s31 = sshll.u32 [#allocation5], 4
      %s32 = int_to_ptr.vmem [resolvable:$true] %s31
      %34 = dma.vmem_to_hbm [thread:$0]  %s32, 128, %s1, [#allocation4]
    $region13: #{tpu_custom_call.1} parent=1 // pred_fallthru
      _
    // Predicated region
    $region14: #{tpu_custom_call.1} parent=1 // pred_check
      _
    $region15: #{tpu_custom_call.1} parent=1 // pred_check_branch
      %36 = sbr.rel (0) target = $region17
    $region16: #{tpu_custom_call.1} parent=1 // pred_region
      %37 = dma.done [#allocation4], 128
    $region17: #{tpu_custom_call.1} parent=1 // pred_fallthru
      _
    %38 = vsyncpa [#allocation3], 1
    %39 = vsyncpa [#allocation4], 1

</llo_original>
